<compile_context>
chip_gen: v7x
topology: tpu7x:2x2x1
jax: 0.10.0
libtpu: 0.0.40
codegen_flags: <defaults>
</compile_context>

<pallas_src>
import functools
import math

import jax
import jax.numpy as jnp
from jax.experimental import pallas as pl
from jax.experimental.pallas import tpu as pltpu


# ---------------------------------------------------------------------------
# Kernel
# ---------------------------------------------------------------------------
def _attention_kernel(q_ref, k_ref, v_ref, o_ref, m_scr, l_scr, acc_scr,
                      *, compute_dtype, exact_recip):
    """One (g_blk, q_blk, D) query tile vs one (g_blk, kv_blk, D) K/V tile."""
    kv_idx = pl.program_id(2)

    head_dim = q_ref.shape[-1]
    scale = 1.0 / math.sqrt(head_dim)

    # Fold the softmax scale into q (much smaller than the score tile), then
    # feed the MXU in its native dtype with f32 accumulation.
    q = (q_ref[...] * scale).astype(compute_dtype)      # (g, q_blk, D)
    k = k_ref[...].astype(compute_dtype)                 # (g, kv_blk, D)
    v = v_ref[...].astype(compute_dtype)                 # (g, kv_blk, D)

    # Scores: contract over D directly (no explicit K transpose), f32 acc.
    s = jnp.einsum("gqd,gkd->gqk", q, k, preferred_element_type=jnp.float32)
    m_cur = jnp.max(s, axis=-1, keepdims=True)           # (g, q_blk, 1) f32

    @pl.when(kv_idx == 0)
    def _first_step():
        # First KV tile: write stats/accumulator directly — saves a full f32
        # zero-store plus a read-multiply rescale (matters most on v5e).
        p = jnp.exp(s - m_cur)
        m_scr[...] = m_cur
        l_scr[...] = jnp.sum(p, axis=-1, keepdims=True)
        acc_scr[...] = jnp.einsum("gqk,gkd->gqd", p.astype(compute_dtype), v,
                                  preferred_element_type=jnp.float32)

    @pl.when(kv_idx > 0)
    def _online_update():
        m_prev = m_scr[...]
        m_new = jnp.maximum(m_prev, m_cur)
        alpha = jnp.exp(m_prev - m_new)                   # EUP
        p = jnp.exp(s - m_new)                            # EUP, f32
        l_scr[...] = alpha * l_scr[...] + jnp.sum(p, axis=-1, keepdims=True)
        acc_scr[...] = alpha * acc_scr[...] + jnp.einsum(
            "gqk,gkd->gqd", p.astype(compute_dtype), v,
            preferred_element_type=jnp.float32)
        m_scr[...] = m_new

    @pl.when(kv_idx == pl.num_programs(2) - 1)
    def _finalize():
        l = l_scr[...]
        if exact_recip:
            o_ref[...] = (acc_scr[...] / l).astype(o_ref.dtype)
        else:
            # Reciprocal-multiply on the EUP instead of a VALU divide.
            o_ref[...] = (acc_scr[...] * pl.reciprocal(l, approx=True)
                          ).astype(o_ref.dtype)


# ---------------------------------------------------------------------------
# Block-size selection (sized against the actual chip's VMEM).
# ---------------------------------------------------------------------------
_MAX_SEQ_TILE = 512


def _round_up(x, m):
    return -(-x // m) * m


def _vmem_capacity_bytes():
    try:
        return int(pltpu.get_tpu_info().vmem_capacity_bytes)
    except Exception:
        return 64 * 1024 * 1024   # conservative default (v7x per-core VMEM)


def _vmem_estimate(g_blk, q_blk, kv_blk, head_dim, in_bytes):
    d_lane = _round_up(head_dim, 128)
    q_sub = _round_up(q_blk, 8)
    kv_sub = _round_up(kv_blk, 8)
    kv_lane = _round_up(kv_blk, 128)
    qo = 2 * 2 * g_blk * q_sub * d_lane * in_bytes      # q + out, double-buffered
    kv = 2 * 2 * g_blk * kv_sub * d_lane * in_bytes     # k + v, double-buffered
    scratch = g_blk * q_sub * (d_lane + 2 * 128) * 4    # f32 acc + m + l
    temps = 4 * g_blk * q_sub * kv_lane * 4             # f32 score/exp/p temps
    return qo + kv + scratch + temps


def _tile_candidates(n, cap=_MAX_SEQ_TILE):
    """Divisors of n (<= cap) usable as a seq tile, best candidates first."""
    cands = [d for d in range(min(n, cap), 0, -1)
             if n % d == 0 and (d % 8 == 0 or d == n)]
    if not cands:
        cands = [n]                      # must use the full extent
    # Prefer lane-aligned (128-multiple) tiles, then larger tiles.
    cands.sort(key=lambda d: (d % 128 == 0, d), reverse=True)
    return cands


def _pick_g_block(total_g, g_cap, fits):
    for g in range(min(total_g, g_cap), 0, -1):
        if total_g % g == 0 and fits(g):
            return g
    return None


def _choose_blocks(total_g, seq, head_dim, in_bytes, budget):
    seq_cands = _tile_candidates(seq)
    for q_blk in seq_cands:
        # Keep at least one "parallel" grid axis of extent >= 2 where possible
        # so both v7x TensorCores get work.
        if seq // q_blk >= 2 or total_g <= 1:
            g_cap = 64
        else:
            g_cap = max(1, total_g // 2)
        for kv_blk in seq_cands:
            def fits(g, q_blk=q_blk, kv_blk=kv_blk):
                return _vmem_estimate(g, q_blk, kv_blk, head_dim,
                                      in_bytes) <= budget
            g_blk = _pick_g_block(total_g, g_cap, fits)
            if g_blk is not None:
                return g_blk, q_blk, kv_blk
    # Last resort: smallest tiles (most conservative configuration available).
    return 1, seq_cands[-1], seq_cands[-1]


# ---------------------------------------------------------------------------
# Public wrapper
# ---------------------------------------------------------------------------
def self_attention(query, key, value):
    """Scaled dot-product attention. query/key/value: (B, H, S, D)."""
    B, H, S, D = query.shape
    assert key.shape == (B, H, S, D) and value.shape == (B, H, S, D)
    assert key.dtype == query.dtype and value.dtype == query.dtype

    G = B * H
    q = query.reshape(G, S, D)
    k = key.reshape(G, S, D)
    v = value.reshape(G, S, D)

    in_bytes = jnp.dtype(query.dtype).itemsize
    capacity = _vmem_capacity_bytes()
    budget = max(16 << 20, min(int(capacity * 0.45), 48 << 20))
    vmem_limit = max(min(int(capacity * 0.75), 96 << 20), budget + (16 << 20))

    g_blk, q_blk, kv_blk = _choose_blocks(G, S, D, in_bytes, budget)
    grid = (G // g_blk, S // q_blk, S // kv_blk)

    # bf16 is MXU-native on v5e/v6e/v7x; f32 operands take a ~3x slower
    # multi-pass MXU path, so down-cast for the matmuls (f32 accumulation,
    # f32 softmax statistics).
    compute_dtype = jnp.bfloat16 if query.dtype == jnp.float32 else query.dtype
    exact_recip = query.dtype == jnp.float32   # exact normalization for f32 out

    kernel = functools.partial(_attention_kernel,
                               compute_dtype=compute_dtype,
                               exact_recip=exact_recip)

    qo_spec = pl.BlockSpec((g_blk, q_blk, D), lambda g, i, t: (g, i, 0))
    kv_spec = pl.BlockSpec((g_blk, kv_blk, D), lambda g, i, t: (g, t, 0))

    out = pl.pallas_call(
        kernel,
        out_shape=jax.ShapeDtypeStruct((G, S, D), query.dtype),
        grid_spec=pltpu.PrefetchScalarGridSpec(
            num_scalar_prefetch=0,
            grid=grid,
            in_specs=[qo_spec, kv_spec, kv_spec],
            out_specs=qo_spec,
            scratch_shapes=[
                pltpu.VMEM((g_blk, q_blk, 1), jnp.float32),  # running max m
                pltpu.VMEM((g_blk, q_blk, 1), jnp.float32),  # running sum l
                pltpu.VMEM((g_blk, q_blk, D), jnp.float32),  # f32 accumulator
            ],
        ),
        compiler_params=pltpu.CompilerParams(
            dimension_semantics=("parallel", "parallel", "arbitrary"),
            vmem_limit_bytes=vmem_limit,
        ),
    )(q, k, v)

    return out.reshape(B, H, S, D)


# ---------------------------------------------------------------------------
# Reference + self-test
# ---------------------------------------------------------------------------
def _reference(query, key, value):
    d = query.shape[-1]
    qf = query.astype(jnp.float32) / jnp.sqrt(jnp.float32(d))
    attn = jnp.matmul(qf, jnp.swapaxes(key.astype(jnp.float32), 2, 3))
    attn = jax.nn.softmax(attn, axis=-1)
    return jnp.matmul(attn, value.astype(jnp.float32))


if __name__ == "__main__":
    rng = jax.random.PRNGKey(0)

    # --- small float32 case (B=2, H=4, S=8, D=32) ---------------------------
    kq, kk, kv_, rng = jax.random.split(rng, 4)
    B, H, S, D = 2, 4, 8, 32
    q = jax.random.normal(kq, (B, H, S, D), dtype=jnp.float32)
    k = jax.random.normal(kk, (B, H, S, D), dtype=jnp.float32)
    v = jax.random.normal(kv_, (B, H, S, D), dtype=jnp.float32)

    out = self_attention(q, k, v)
    jax.block_until_ready(out)
    ref = _reference(q, k, v)
    assert out.shape == (B, H, S, D) and out.dtype == jnp.float32
    # MXU operands are bf16 (f32 accumulation), so allow a few 1e-2 of noise.
    assert jnp.allclose(out, ref, atol=5e-2, rtol=5e-2)

    # --- small bfloat16 case -------------------------------------------------
    qb, kb, vb = (x.astype(jnp.bfloat16) for x in (q, k, v))
    outb = self_attention(qb, kb, vb)
    jax.block_until_ready(outb)
    refb = _reference(qb, kb, vb)
    assert outb.dtype == jnp.bfloat16
    assert jnp.allclose(outb.astype(jnp.float32), refb, atol=3e-2, rtol=3e-2)

    # --- larger bf16 case exercising q/kv tiling + multi-step online softmax -
    kq2, kk2, kv2, rng = jax.random.split(rng, 4)
    B2, H2, S2, D2 = 1, 2, 1024, 64
    q2 = jax.random.normal(kq2, (B2, H2, S2, D2), dtype=jnp.bfloat16)
    k2 = jax.random.normal(kk2, (B2, H2, S2, D2), dtype=jnp.bfloat16)
    v2 = jax.random.normal(kv2, (B2, H2, S2, D2), dtype=jnp.bfloat16)
    out2 = self_attention(q2, k2, v2)
    jax.block_until_ready(out2)
    ref2 = _reference(q2, k2, v2)
    assert out2.shape == (B2, H2, S2, D2)
    assert jnp.allclose(out2.astype(jnp.float32), ref2, atol=3e-2, rtol=3e-2)

    print("KERNEL_OK")
</pallas_src>

<mosaic_0001>
module attributes {stable_mosaic.version = 11 : i64} {
  func.func @_attention_kernel(%arg0: i32, %arg1: i32, %arg2: i32, %arg3: memref<4x8x32xf32, #tpu.memory_space<vmem>>, %arg4: memref<4x8x32xf32, #tpu.memory_space<vmem>>, %arg5: memref<4x8x32xf32, #tpu.memory_space<vmem>>, %arg6: memref<4x8x32xf32, #tpu.memory_space<vmem>>, %arg7: memref<4x8x1xf32, #tpu.memory_space<vmem>>, %arg8: memref<4x8x1xf32, #tpu.memory_space<vmem>>, %arg9: memref<4x8x32xf32, #tpu.memory_space<vmem>>) attributes {dimension_semantics = [#tpu.dimension_semantics<parallel>, #tpu.dimension_semantics<parallel>, #tpu.dimension_semantics<arbitrary>], iteration_bounds = array<i64: 2, 1, 1>, scalar_prefetch = 0 : i64, scratch_operands = 3 : i64, tpu.core_type = #tpu.core_type<tc>, window_params = [{transform_indices = @transform_0, window_bounds = array<i64: 4, 8, 32>}, {transform_indices = @transform_1, window_bounds = array<i64: 4, 8, 32>}, {transform_indices = @transform_2, window_bounds = array<i64: 4, 8, 32>}, {transform_indices = @transform_3, window_bounds = array<i64: 4, 8, 32>}]} {
    %c0 = arith.constant 0 : index
    %c0_0 = arith.constant 0 : index
    %c0_1 = arith.constant 0 : index
    %0 = vector.load %arg3[%c0, %c0_0, %c0_1] : memref<4x8x32xf32, #tpu.memory_space<vmem>>, vector<4x8x32xf32>
    %cst = arith.constant 0.176776692 : f32
    %1 = vector.broadcast %cst : f32 to vector<4x8x32xf32>
    %2 = arith.mulf %0, %1 : vector<4x8x32xf32>
    %3 = arith.truncf %2 : vector<4x8x32xf32> to vector<4x8x32xbf16>
    %c0_2 = arith.constant 0 : index
    %c0_3 = arith.constant 0 : index
    %c0_4 = arith.constant 0 : index
    %4 = vector.load %arg4[%c0_2, %c0_3, %c0_4] : memref<4x8x32xf32, #tpu.memory_space<vmem>>, vector<4x8x32xf32>
    %5 = arith.truncf %4 : vector<4x8x32xf32> to vector<4x8x32xbf16>
    %c0_5 = arith.constant 0 : index
    %c0_6 = arith.constant 0 : index
    %c0_7 = arith.constant 0 : index
    %6 = vector.load %arg5[%c0_5, %c0_6, %c0_7] : memref<4x8x32xf32, #tpu.memory_space<vmem>>, vector<4x8x32xf32>
    %7 = arith.truncf %6 : vector<4x8x32xf32> to vector<4x8x32xbf16>
    "tpu.trace_start"() <{level = 10 : i32, message = "gqd,gkd->gqk"}> : () -> ()
    %cst_8 = arith.constant dense<0.000000e+00> : vector<4x8x8xf32>
    %8 = tpu.matmul %3, %5, %cst_8 {dimension_numbers = #tpu.dot_dimension_numbers<[2], [2], [1], [1], [0, 0, 0, 1, 1, 1], [0], [0]>} : vector<4x8x32xbf16>, vector<4x8x32xbf16>, vector<4x8x8xf32> -> vector<4x8x8xf32>
    "tpu.trace_stop"() : () -> ()
    %cst_9 = arith.constant dense<0xFF800000> : vector<4x8xf32>
    %9 = vector.multi_reduction <maximumf>, %8, %cst_9 [2] : vector<4x8x8xf32> to vector<4x8xf32>
    %10 = vector.shape_cast %9 : vector<4x8xf32> to vector<4x8x1xf32>
    %c0_i32 = arith.constant 0 : i32
    %11 = arith.cmpi eq, %arg2, %c0_i32 : i32
    %12 = arith.extui %11 : i1 to i32
    %c0_i32_10 = arith.constant 0 : i32
    %13 = arith.cmpi ne, %12, %c0_i32_10 : i32
    scf.if %13 {
      %20 = vector.broadcast %10 : vector<4x8x1xf32> to vector<4x8x8xf32>
      %21 = arith.subf %8, %20 : vector<4x8x8xf32>
      %22 = math.exp %21 : vector<4x8x8xf32>
      %c0_15 = arith.constant 0 : index
      %c0_16 = arith.constant 0 : index
      %c0_17 = arith.constant 0 : index
      %23 = vector.load %arg7[%c0_15, %c0_16, %c0_17] : memref<4x8x1xf32, #tpu.memory_space<vmem>>, vector<4x8x1xf32>
      tpu.vector_store %arg7[%c0_15, %c0_16, %c0_17], %10 {strides = array<i32>} : memref<4x8x1xf32, #tpu.memory_space<vmem>>, vector<4x8x1xf32>,
      %cst_18 = arith.constant dense<0.000000e+00> : vector<4x8xf32>
      %24 = vector.multi_reduction <add>, %22, %cst_18 [2] : vector<4x8x8xf32> to vector<4x8xf32>
      %25 = vector.shape_cast %24 : vector<4x8xf32> to vector<4x8x1xf32>
      %c0_19 = arith.constant 0 : index
      %c0_20 = arith.constant 0 : index
      %c0_21 = arith.constant 0 : index
      %26 = vector.load %arg8[%c0_19, %c0_20, %c0_21] : memref<4x8x1xf32, #tpu.memory_space<vmem>>, vector<4x8x1xf32>
      tpu.vector_store %arg8[%c0_19, %c0_20, %c0_21], %25 {strides = array<i32>} : memref<4x8x1xf32, #tpu.memory_space<vmem>>, vector<4x8x1xf32>,
      %27 = arith.truncf %22 : vector<4x8x8xf32> to vector<4x8x8xbf16>
      "tpu.trace_start"() <{level = 10 : i32, message = "gqk,gkd->gqd"}> : () -> ()
      %cst_22 = arith.constant dense<0.000000e+00> : vector<4x8x32xf32>
      %28 = tpu.matmul %27, %7, %cst_22 {dimension_numbers = #tpu.dot_dimension_numbers<[2], [1], [1], [2], [0, 0, 0, 1, 1, 2], [0], [0]>} : vector<4x8x8xbf16>, vector<4x8x32xbf16>, vector<4x8x32xf32> -> vector<4x8x32xf32>
      "tpu.trace_stop"() : () -> ()
      %c0_23 = arith.constant 0 : index
      %c0_24 = arith.constant 0 : index
      %c0_25 = arith.constant 0 : index
      %29 = vector.load %arg9[%c0_23, %c0_24, %c0_25] : memref<4x8x32xf32, #tpu.memory_space<vmem>>, vector<4x8x32xf32>
      tpu.vector_store %arg9[%c0_23, %c0_24, %c0_25], %28 {strides = array<i32>} : memref<4x8x32xf32, #tpu.memory_space<vmem>>, vector<4x8x32xf32>,
    } else {
    }
    %c0_i32_11 = arith.constant 0 : i32
    %14 = arith.cmpi sgt, %arg2, %c0_i32_11 : i32
    %15 = arith.extui %14 : i1 to i32
    %c0_i32_12 = arith.constant 0 : i32
    %16 = arith.cmpi ne, %15, %c0_i32_12 : i32
    scf.if %16 {
      %c0_15 = arith.constant 0 : index
      %c0_16 = arith.constant 0 : index
      %c0_17 = arith.constant 0 : index
      %20 = vector.load %arg7[%c0_15, %c0_16, %c0_17] : memref<4x8x1xf32, #tpu.memory_space<vmem>>, vector<4x8x1xf32>
      %21 = arith.maximumf %20, %10 : vector<4x8x1xf32>
      %22 = arith.subf %20, %21 : vector<4x8x1xf32>
      %23 = math.exp %22 : vector<4x8x1xf32>
      %24 = vector.broadcast %21 : vector<4x8x1xf32> to vector<4x8x8xf32>
      %25 = arith.subf %8, %24 : vector<4x8x8xf32>
      %26 = math.exp %25 : vector<4x8x8xf32>
      %c0_18 = arith.constant 0 : index
      %c0_19 = arith.constant 0 : index
      %c0_20 = arith.constant 0 : index
      %27 = vector.load %arg8[%c0_18, %c0_19, %c0_20] : memref<4x8x1xf32, #tpu.memory_space<vmem>>, vector<4x8x1xf32>
      %28 = arith.mulf %23, %27 : vector<4x8x1xf32>
      %cst_21 = arith.constant dense<0.000000e+00> : vector<4x8xf32>
      %29 = vector.multi_reduction <add>, %26, %cst_21 [2] : vector<4x8x8xf32> to vector<4x8xf32>
      %30 = vector.shape_cast %29 : vector<4x8xf32> to vector<4x8x1xf32>
      %31 = arith.addf %28, %30 : vector<4x8x1xf32>
      %c0_22 = arith.constant 0 : index
      %c0_23 = arith.constant 0 : index
      %c0_24 = arith.constant 0 : index
      %32 = vector.load %arg8[%c0_22, %c0_23, %c0_24] : memref<4x8x1xf32, #tpu.memory_space<vmem>>, vector<4x8x1xf32>
      tpu.vector_store %arg8[%c0_22, %c0_23, %c0_24], %31 {strides = array<i32>} : memref<4x8x1xf32, #tpu.memory_space<vmem>>, vector<4x8x1xf32>,
      %c0_25 = arith.constant 0 : index
      %c0_26 = arith.constant 0 : index
      %c0_27 = arith.constant 0 : index
      %33 = vector.load %arg9[%c0_25, %c0_26, %c0_27] : memref<4x8x32xf32, #tpu.memory_space<vmem>>, vector<4x8x32xf32>
      %34 = vector.broadcast %23 : vector<4x8x1xf32> to vector<4x8x32xf32>
      %35 = arith.mulf %34, %33 : vector<4x8x32xf32>
      %36 = arith.truncf %26 : vector<4x8x8xf32> to vector<4x8x8xbf16>
      "tpu.trace_start"() <{level = 10 : i32, message = "gqk,gkd->gqd"}> : () -> ()
      %cst_28 = arith.constant dense<0.000000e+00> : vector<4x8x32xf32>
      %37 = tpu.matmul %36, %7, %cst_28 {dimension_numbers = #tpu.dot_dimension_numbers<[2], [1], [1], [2], [0, 0, 0, 1, 1, 2], [0], [0]>} : vector<4x8x8xbf16>, vector<4x8x32xbf16>, vector<4x8x32xf32> -> vector<4x8x32xf32>
      "tpu.trace_stop"() : () -> ()
      %38 = arith.addf %35, %37 : vector<4x8x32xf32>
      %c0_29 = arith.constant 0 : index
      %c0_30 = arith.constant 0 : index
      %c0_31 = arith.constant 0 : index
      %39 = vector.load %arg9[%c0_29, %c0_30, %c0_31] : memref<4x8x32xf32, #tpu.memory_space<vmem>>, vector<4x8x32xf32>
      tpu.vector_store %arg9[%c0_29, %c0_30, %c0_31], %38 {strides = array<i32>} : memref<4x8x32xf32, #tpu.memory_space<vmem>>, vector<4x8x32xf32>,
      %c0_32 = arith.constant 0 : index
      %c0_33 = arith.constant 0 : index
      %c0_34 = arith.constant 0 : index
      %40 = vector.load %arg7[%c0_32, %c0_33, %c0_34] : memref<4x8x1xf32, #tpu.memory_space<vmem>>, vector<4x8x1xf32>
      tpu.vector_store %arg7[%c0_32, %c0_33, %c0_34], %21 {strides = array<i32>} : memref<4x8x1xf32, #tpu.memory_space<vmem>>, vector<4x8x1xf32>,
    } else {
    }
    %c0_i32_13 = arith.constant 0 : i32
    %17 = arith.cmpi eq, %arg2, %c0_i32_13 : i32
    %18 = arith.extui %17 : i1 to i32
    %c0_i32_14 = arith.constant 0 : i32
    %19 = arith.cmpi ne, %18, %c0_i32_14 : i32
    scf.if %19 {
      %c0_15 = arith.constant 0 : index
      %c0_16 = arith.constant 0 : index
      %c0_17 = arith.constant 0 : index
      %20 = vector.load %arg8[%c0_15, %c0_16, %c0_17] : memref<4x8x1xf32, #tpu.memory_space<vmem>>, vector<4x8x1xf32>
      %c0_18 = arith.constant 0 : index
      %c0_19 = arith.constant 0 : index
      %c0_20 = arith.constant 0 : index
      %21 = vector.load %arg9[%c0_18, %c0_19, %c0_20] : memref<4x8x32xf32, #tpu.memory_space<vmem>>, vector<4x8x32xf32>
      %22 = vector.broadcast %20 : vector<4x8x1xf32> to vector<4x8x32xf32>
      %23 = arith.divf %21, %22 : vector<4x8x32xf32>
      %c0_21 = arith.constant 0 : index
      %c0_22 = arith.constant 0 : index
      %c0_23 = arith.constant 0 : index
      %24 = vector.load %arg6[%c0_21, %c0_22, %c0_23] : memref<4x8x32xf32, #tpu.memory_space<vmem>>, vector<4x8x32xf32>
      tpu.vector_store %arg6[%c0_21, %c0_22, %c0_23], %23 {strides = array<i32>} : memref<4x8x32xf32, #tpu.memory_space<vmem>>, vector<4x8x32xf32>,
    } else {
    }
    return
  }
  func.func @transform_0(%arg0: i32, %arg1: i32, %arg2: i32) -> (i32, i32, i32) {
    %c0_i32 = arith.constant 0 : i32
    %c0_i32_0 = arith.constant 0 : i32
    return %arg0, %arg1, %c0_i32 : i32, i32, i32
  }
  func.func @transform_1(%arg0: i32, %arg1: i32, %arg2: i32) -> (i32, i32, i32) {
    %c0_i32 = arith.constant 0 : i32
    %c0_i32_0 = arith.constant 0 : i32
    return %arg0, %arg2, %c0_i32 : i32, i32, i32
  }
  func.func @transform_2(%arg0: i32, %arg1: i32, %arg2: i32) -> (i32, i32, i32) {
    %c0_i32 = arith.constant 0 : i32
    %c0_i32_0 = arith.constant 0 : i32
    return %arg0, %arg2, %c0_i32 : i32, i32, i32
  }
  func.func @transform_3(%arg0: i32, %arg1: i32, %arg2: i32) -> (i32, i32, i32) {
    %c0_i32 = arith.constant 0 : i32
    %c0_i32_0 = arith.constant 0 : i32
    return %arg0, %arg1, %c0_i32 : i32, i32, i32
  }
}

</mosaic_0001>

<llo_original>
// kernel: tpu_custom_call.1
$region0: #{tpu_custom_call.1}
  #allocation0 [shape = 'u32[]', space=smem, size = 0x4, offset = 0x4, fixed_abs, tag = 'smem constant byte address 0x4 - core index']
  #allocation1 [shape = 'u32[144,128]{1,0:T(1,128)}', space=vmem, size = 0x12000, scoped, tag = 'internal scratch']
  #allocation2 [shape = 'f32[4,8,1]{2,1,0:T(8,128)}', space=vmem, size = 0x4000, scoped, tag = 'scratch operand']
  #allocation3 [shape = 'f32[4,8,1]{2,1,0:T(8,128)}', space=vmem, size = 0x4000, scoped, tag = 'scratch operand']
  #allocation4 [shape = 'f32[4,8,32]{2,1,0:T(8,128)}', space=vmem, size = 0x4000, scoped, tag = 'scratch operand']
  %s0 = inlined_call_operand.hbm [shape: f32[8,8,32], index: 0, kind: input, shape index: {}]
  %s1 = inlined_call_operand.hbm [shape: f32[8,8,32], index: 1, kind: input, shape index: {}]
  %s2 = inlined_call_operand.hbm [shape: f32[8,8,32], index: 2, kind: input, shape index: {}]
  %s3 = inlined_call_operand.hbm [shape: f32[8,8,32], index: 3, kind: output, shape index: {}]
  %s4 = sld [smem:[#allocation0]]
  $region69: #{tpu_custom_call.1} parent=0
    _
  %s6 = ssub.s32 1, %s4
  %s7 = scalar_select 0, %s6, %s4
  $region1: #{tpu_custom_call.1} parent=0
    #allocation5 [shape = 'u8[32768]{0}', space=vmem, size = 0x8000, scoped, tag = 'input window, operand 0']
    #allocation6 [shape = 's32[2]{0}', space=sflag, size = 0x8, scoped, tag = 'scoped memory for tpu_custom_call.1']
    #allocation7 [shape = 's32[2]{0}', space=sflag, size = 0x8, scoped, tag = 'scoped memory for tpu_custom_call.1']
    #allocation8 [shape = 'u8[32768]{0}', space=vmem, size = 0x8000, scoped, tag = 'input window, operand 1']
    #allocation9 [shape = 's32[2]{0}', space=sflag, size = 0x8, scoped, tag = 'scoped memory for tpu_custom_call.1']
    #allocation10 [shape = 'u8[32768]{0}', space=vmem, size = 0x8000, scoped, tag = 'input window, operand 2']
    #allocation11 [shape = 'u8[32768]{0}', space=vmem, size = 0x8000, scoped, tag = 'output window, operand 0']
    %8 = vsyncpa [#allocation6], 0
    %s9 = scalar_lea.sflag [#allocation6], 1
    %10 = vsyncpa %s9, 0
    %11 = vsyncpa [#allocation9], 0
    %s12 = scalar_lea.sflag [#allocation9], 1
    %13 = vsyncpa %s12, 0
    %14 = vsyncpa [#allocation7], 0
    %s15 = scalar_lea.sflag [#allocation7], 1
    %16 = vsyncpa %s15, 0
    loop: start=0, step=1, limit=4
    $region2: #{tpu_custom_call.1} parent=1 // loop_pre_header
      _
    $region3: #{tpu_custom_call.1} parent=1 // loop_header
      %s18 = sphi 0, %s22
      %p19 = scmp.ge.s32.totalorder %s18, 4
      %s25 = sphi 0, %s44
      %s26 = sphi 0, %s40
      %s27 = sphi 0, %s36
      %s28 = sphi 0, %s25
      %s29 = sphi 0, %s26
      %s30 = sphi 0, %s27
      %s31 = sphi 0, %s28
      %s32 = sphi 0, %s29
      %s33 = sphi 0, %s30
      %s49 = sphi 0, %s51
      %s52 = sphi 0, %s49
      %s53 = sphi 0, %s52
      %s69 = sphi 0, %s53
      %s77 = sphi 0, %s79
      %s80 = sphi 0, %s77
      %s81 = sphi 0, %s80
      %s97 = sphi 0, %s81
      %s105 = sphi 0, %s107
      %s108 = sphi 0, %s105
      %s109 = sphi 0, %s108
      %s125 = sphi 0, %s109
      %s133 = sphi 0, %s135
      %s136 = sphi 0, %s133
      %s137 = sphi 0, %s136
      %s153 = sphi 0, %s137
    $region4: #{tpu_custom_call.1} parent=1 // loop_header_branch
      %21 = sbr.rel (%p19) target = $region8
    $region5: #{tpu_custom_call.1} parent=1 // loop_body
      %s23 = ssub.s32 %s18, 1
      %s24 = ssub.s32 %s18, 2
      %s34 = sadd.s32 1, %s27
      %p35 = scmp.ge.s32.totalorder %s34, 1
      %s36 = scalar_select %p35, 0, %s34
      %s37 = sadd.s32 1, %s26
      %s38 = scalar_select %p35, %s37, %s26
      %p39 = scmp.ge.s32.totalorder %s38, 1
      %s40 = scalar_select %p39, 0, %s38
      %s41 = sadd.s32 1, %s25
      %s42 = scalar_select %p39, %s41, %s25
      %p43 = scmp.ge.s32.totalorder %s42, 2
      %s44 = scalar_select %p43, 0, %s42
      %s45 = ssub.s32 %s25, %s44
      %s46 = ssub.s32 %s26, %s40
      %s47 = sor.u32 %s45, %s46
      %p48 = scmp.eq.s32.totalorder %s47, 0
      %s50 = sadd.s32 %s49, 1
      %s51 = scalar_select %p48, %s49, %s50
      %p54 = pneg %p48
      %p55 = scmp.eq.s32.totalorder %s18, 1
      %p56 = por %p54, %p55
      %p57 = scmp.ne.s32.totalorder %s49, %s52
      %p58 = scmp.eq.s32.totalorder %s18, 0
      %p59 = por %p57, %p58
      %p60 = scmp.ne.s32.totalorder %s49, %s52
      %p61 = scmp.eq.s32.totalorder %s23, 1
      %p62 = por %p60, %p61
      %p63 = scmp.ne.s32.totalorder %s52, %s53
      %p64 = scmp.eq.s32.totalorder %s23, 0
      %p65 = por %p63, %p64
      %p66 = scmp.ne.s32.totalorder %s52, %s53
      %p67 = scmp.eq.s32.totalorder %s24, 1
      %p68 = por %p66, %p67
      %p70 = scmp.ne.s32.totalorder %s53, %s69
      %p71 = scmp.eq.s32.totalorder %s24, 0
      %p72 = por %p70, %p71
      %s73 = ssub.s32 %s25, %s44
      %s74 = ssub.s32 %s27, %s36
      %s75 = sor.u32 %s73, %s74
      %p76 = scmp.eq.s32.totalorder %s75, 0
      %s78 = sadd.s32 %s77, 1
      %s79 = scalar_select %p76, %s77, %s78
      %p82 = pneg %p76
      %p83 = scmp.eq.s32.totalorder %s18, 1
      %p84 = por %p82, %p83
      %p85 = scmp.ne.s32.totalorder %s77, %s80
      %p86 = scmp.eq.s32.totalorder %s18, 0
      %p87 = por %p85, %p86
      %p88 = scmp.ne.s32.totalorder %s77, %s80
      %p89 = scmp.eq.s32.totalorder %s23, 1
      %p90 = por %p88, %p89
      %p91 = scmp.ne.s32.totalorder %s80, %s81
      %p92 = scmp.eq.s32.totalorder %s23, 0
      %p93 = por %p91, %p92
      %p94 = scmp.ne.s32.totalorder %s80, %s81
      %p95 = scmp.eq.s32.totalorder %s24, 1
      %p96 = por %p94, %p95
      %p98 = scmp.ne.s32.totalorder %s81, %s97
      %p99 = scmp.eq.s32.totalorder %s24, 0
      %p100 = por %p98, %p99
      %s101 = ssub.s32 %s25, %s44
      %s102 = ssub.s32 %s27, %s36
      %s103 = sor.u32 %s101, %s102
      %p104 = scmp.eq.s32.totalorder %s103, 0
      %s106 = sadd.s32 %s105, 1
      %s107 = scalar_select %p104, %s105, %s106
      %p110 = pneg %p104
      %p111 = scmp.eq.s32.totalorder %s18, 1
      %p112 = por %p110, %p111
      %p113 = scmp.ne.s32.totalorder %s105, %s108
      %p114 = scmp.eq.s32.totalorder %s18, 0
      %p115 = por %p113, %p114
      %p116 = scmp.ne.s32.totalorder %s105, %s108
      %p117 = scmp.eq.s32.totalorder %s23, 1
      %p118 = por %p116, %p117
      %p119 = scmp.ne.s32.totalorder %s108, %s109
      %p120 = scmp.eq.s32.totalorder %s23, 0
      %p121 = por %p119, %p120
      %p122 = scmp.ne.s32.totalorder %s108, %s109
      %p123 = scmp.eq.s32.totalorder %s24, 1
      %p124 = por %p122, %p123
      %p126 = scmp.ne.s32.totalorder %s109, %s125
      %p127 = scmp.eq.s32.totalorder %s24, 0
      %p128 = por %p126, %p127
      %s129 = ssub.s32 %s25, %s44
      %s130 = ssub.s32 %s26, %s40
      %s131 = sor.u32 %s129, %s130
      %p132 = scmp.eq.s32.totalorder %s131, 0
      %s134 = sadd.s32 %s133, 1
      %s135 = scalar_select %p132, %s133, %s134
      %p138 = pneg %p132
      %p139 = scmp.eq.s32.totalorder %s18, 1
      %p140 = por %p138, %p139
      %p141 = scmp.ne.s32.totalorder %s133, %s136
      %p142 = scmp.eq.s32.totalorder %s18, 0
      %p143 = por %p141, %p142
      %p144 = scmp.ne.s32.totalorder %s133, %s136
      %p145 = scmp.eq.s32.totalorder %s23, 1
      %p146 = por %p144, %p145
      %p147 = scmp.ne.s32.totalorder %s136, %s137
      %p148 = scmp.eq.s32.totalorder %s23, 0
      %p149 = por %p147, %p148
      %p150 = scmp.ne.s32.totalorder %s136, %s137
      %p151 = scmp.eq.s32.totalorder %s24, 1
      %p152 = por %p150, %p151
      %p154 = scmp.ne.s32.totalorder %s137, %s153
      %p155 = scmp.eq.s32.totalorder %s24, 0
      %p156 = por %p154, %p155
      %p157 = scmp.le.s32.totalorder 1, %s18
      %p158 = scmp.lt.s32.totalorder %s18, 3
      %p159 = pnand %p157, %p158
      %p160 = pneg %p159
      // Predicated region
      $region9: #{tpu_custom_call.1} parent=5 // pred_check
        _
      $region10: #{tpu_custom_call.1} parent=5 // pred_check_branch
        %162 = sbr.rel (%p159) target = $region12
      $region11: #{tpu_custom_call.1} parent=5 // pred_region
        %s163 = ssub.s32 %s18, 1
      $region12: #{tpu_custom_call.1} parent=5 // pred_fallthru
        _
      %p164 = scmp.lt.s32.totalorder %s18, 2
      // Predicated region
      $region13: #{tpu_custom_call.1} parent=5 // pred_check
        %p165 = pneg %p164
      $region14: #{tpu_custom_call.1} parent=5 // pred_check_branch
        %167 = sbr.rel (%p165) target = $region16
      $region15: #{tpu_custom_call.1} parent=5 // pred_region
        // Predicated region
        $region17: #{tpu_custom_call.1} parent=15 // pred_check
          %p168 = pneg %p59
        $region18: #{tpu_custom_call.1} parent=15 // pred_check_branch
          %170 = sbr.rel (%p168) target = $region20
        $region19: #{tpu_custom_call.1} parent=15 // pred_region
          %s171 = sand.u32 %s49, 1
          %s172 = scalar_lea.sflag [#allocation6], %s171
          %s173 = sand.u32 %s49, 1
          %s174 = smul.addr %s173, 32
          %s175 = scalar_lea.vmem [#allocation5], %s174
          %s176 = smul.u32 4, %s25
          %s178 = ssub.s32 512, 512
          %179 = vsyncadd %s172, %s178
          %s180 = sadd.s32 %s26, %s176
          %s181 = smul.addr %s180, 128
          %s182 = scalar_lea.hbm %s0, %s181
          %s183 = sshll.u32 %s175, 4
          %s184 = int_to_ptr.vmem [resolvable:$true] %s183
          %189 = dma.hbm_to_vmem [thread:$0]  %s182, 512, %s184, %s172, 128, 128, 8
        $region20: #{tpu_custom_call.1} parent=15 // pred_fallthru
          _
        // Predicated region
        $region21: #{tpu_custom_call.1} parent=15 // pred_check
          %p190 = pneg %p87
        $region22: #{tpu_custom_call.1} parent=15 // pred_check_branch
          %192 = sbr.rel (%p190) target = $region24
        $region23: #{tpu_custom_call.1} parent=15 // pred_region
          %s193 = sand.u32 %s18, 1
          %s194 = scalar_lea.sflag [#allocation9], %s193
          %s195 = sand.u32 %s77, 1
          %s196 = smul.addr %s195, 32
          %s197 = scalar_lea.vmem [#allocation8], %s196
          %s198 = smul.u32 4, %s25
          %s200 = ssub.s32 512, 512
          %201 = vsyncadd %s194, %s200
          %s202 = sadd.s32 %s27, %s198
          %s203 = smul.addr %s202, 128
          %s204 = scalar_lea.hbm %s1, %s203
          %s205 = sshll.u32 %s197, 4
          %s206 = int_to_ptr.vmem [resolvable:$true] %s205
          %211 = dma.hbm_to_vmem [thread:$0]  %s204, 512, %s206, %s194, 128, 128, 8
        $region24: #{tpu_custom_call.1} parent=15 // pred_fallthru
          _
        // Predicated region
        $region25: #{tpu_custom_call.1} parent=15 // pred_check
          %p212 = pneg %p115
        $region26: #{tpu_custom_call.1} parent=15 // pred_check_branch
          %214 = sbr.rel (%p212) target = $region28
        $region27: #{tpu_custom_call.1} parent=15 // pred_region
          %s215 = sand.u32 %s18, 1
          %s216 = scalar_lea.sflag [#allocation9], %s215
          %s217 = sand.u32 %s105, 1
          %s218 = smul.addr %s217, 32
          %s219 = scalar_lea.vmem [#allocation10], %s218
          %s220 = smul.u32 4, %s25
          %s222 = ssub.s32 512, 512
          %223 = vsyncadd %s216, %s222
          %s224 = sadd.s32 %s27, %s220
          %s225 = smul.addr %s224, 128
          %s226 = scalar_lea.hbm %s2, %s225
          %s227 = sshll.u32 %s219, 4
          %s228 = int_to_ptr.vmem [resolvable:$true] %s227
          %233 = dma.hbm_to_vmem [thread:$0]  %s226, 512, %s228, %s216, 128, 128, 8
        $region28: #{tpu_custom_call.1} parent=15 // pred_fallthru
          _
      $region16: #{tpu_custom_call.1} parent=5 // pred_fallthru
        _
      %p234 = scmp.le.s32.totalorder 1, %s18
      %p235 = scmp.lt.s32.totalorder %s18, 3
      %p236 = pnand %p234, %p235
      %p237 = pneg %p236
      // Predicated region
      $region29: #{tpu_custom_call.1} parent=5 // pred_check
        _
      $region30: #{tpu_custom_call.1} parent=5 // pred_check_branch
        %239 = sbr.rel (%p236) target = $region32
      $region31: #{tpu_custom_call.1} parent=5 // pred_region
        %s240 = ssub.s32 %s18, 1
        %s241 = sand.u32 %s52, 1
        %s242 = scalar_lea.sflag [#allocation6], %s241
        %s243 = sand.u32 %s52, 1
        %s244 = smul.addr %s243, 32
        %s245 = scalar_lea.vmem [#allocation5], %s244
        // Predicated region
        $region33: #{tpu_custom_call.1} parent=31 // pred_check
          %p246 = pneg %p65
        $region34: #{tpu_custom_call.1} parent=31 // pred_check_branch
          %248 = sbr.rel (%p246) target = $region36
        $region35: #{tpu_custom_call.1} parent=31 // pred_region
          %249 = dma.done %s242, 512
        $region36: #{tpu_custom_call.1} parent=31 // pred_fallthru
          _
        %s250 = sand.u32 %s23, 1
        %s251 = scalar_lea.sflag [#allocation9], %s250
        %s252 = sand.u32 %s80, 1
        %s253 = smul.addr %s252, 32
        %s254 = scalar_lea.vmem [#allocation8], %s253
        // Predicated region
        $region37: #{tpu_custom_call.1} parent=31 // pred_check
          %p255 = pneg %p93
        $region38: #{tpu_custom_call.1} parent=31 // pred_check_branch
          %257 = sbr.rel (%p255) target = $region40
        $region39: #{tpu_custom_call.1} parent=31 // pred_region
          %258 = dma.done %s251, 512
        $region40: #{tpu_custom_call.1} parent=31 // pred_fallthru
          _
        %s259 = sand.u32 %s23, 1
        %s260 = scalar_lea.sflag [#allocation9], %s259
        %s261 = sand.u32 %s108, 1
        %s262 = smul.addr %s261, 32
        %s263 = scalar_lea.vmem [#allocation10], %s262
        // Predicated region
        $region41: #{tpu_custom_call.1} parent=31 // pred_check
          %p264 = pneg %p121
        $region42: #{tpu_custom_call.1} parent=31 // pred_check_branch
          %266 = sbr.rel (%p264) target = $region44
        $region43: #{tpu_custom_call.1} parent=31 // pred_region
          %267 = dma.done %s260, 512
        $region44: #{tpu_custom_call.1} parent=31 // pred_fallthru
          _
        %s268 = sand.u32 %s52, 1
        %s269 = scalar_lea.sflag [#allocation6], %s268
        %s270 = sand.u32 %s52, 1
        %s271 = smul.addr %s270, 32
        %s272 = scalar_lea.vmem [#allocation5], %s271
        %p273 = pneg %p65
        %p274 = pneg %p62
        %s275 = sand.u32 %s23, 1
        %s276 = scalar_lea.sflag [#allocation9], %s275
        %s277 = sand.u32 %s80, 1
        %s278 = smul.addr %s277, 32
        %s279 = scalar_lea.vmem [#allocation8], %s278
        %p280 = pneg %p93
        %p281 = pneg %p90
        %s282 = sand.u32 %s23, 1
        %s283 = scalar_lea.sflag [#allocation9], %s282
        %s284 = sand.u32 %s108, 1
        %s285 = smul.addr %s284, 32
        %s286 = scalar_lea.vmem [#allocation10], %s285
        %p287 = pneg %p121
        %p288 = pneg %p118
        %p289 = pneg %p149
        %p290 = pneg %p146
        %s291 = sand.u32 %s136, 1
        %s292 = scalar_lea.sflag [#allocation7], %s291
        %s293 = sand.u32 %s136, 1
        %s294 = smul.addr %s293, 32
        %s295 = scalar_lea.vmem [#allocation11], %s294
        %s296 = smul.u32 4, %s28
        %s297 = smul.u32 4, %s28
        %s298 = smul.u32 4, %s28
        %s299 = smul.u32 4, %s28
        %v301 = vld [vmem:[%s245] sm:$0xff]
        %v302 = vld [vmem:[%s245 + $0x8] sm:$0xff]
        %v303 = vld [vmem:[%s245 + $0x10] sm:$0xff]
        %v304 = vld [vmem:[%s245 + $0x18] sm:$0xff]
        %v305 = vmul.f32 %v301, 0.17677669
        %v306 = vmul.f32 %v302, 0.17677669
        %v307 = vmul.f32 %v303, 0.17677669
        %v308 = vmul.f32 %v304, 0.17677669
        %v309 = vpack.c.bf16 %v305, %v305
        %v310 = vpack.c.bf16 %v306, %v306
        %v311 = vpack.c.bf16 %v307, %v307
        %v312 = vpack.c.bf16 %v308, %v308
        %v313 = vld [vmem:[%s254] sm:$0xff]
        %v314 = vld [vmem:[%s254 + $0x8] sm:$0xff]
        %v315 = vld [vmem:[%s254 + $0x10] sm:$0xff]
        %v316 = vld [vmem:[%s254 + $0x18] sm:$0xff]
        %v317 = vpack.c.bf16 %v313, %v313
        %v318 = vpack.c.bf16 %v314, %v314
        %v319 = vpack.c.bf16 %v315, %v315
        %v320 = vpack.c.bf16 %v316, %v316
        %v321 = vld [vmem:[%s263] sm:$0xff]
        %v322 = vld [vmem:[%s263 + $0x8] sm:$0xff]
        %v323 = vld [vmem:[%s263 + $0x10] sm:$0xff]
        %v324 = vld [vmem:[%s263 + $0x18] sm:$0xff]
        %v325 = vpack.c.bf16 %v321, %v321
        %v326 = vpack.c.bf16 %v322, %v322
        %v327 = vpack.c.bf16 %v323, %v323
        %v328 = vpack.c.bf16 %v324, %v324
        %vm329 = vcmask 261120
        %v331 = vsel %vm329, %v309, 0
        %v334 = vsel %vm329, %v317, 0
        %336 = vmatprep.subr.bf16.mxu0 0
        %337 = vmatpush1.bf16.xpose.msra.mxu0 %v334
        %338 = vmatprep.subr.bf16.mxu0 0
        %339 = vmatpush1.bf16.xpose.msra.mxu0 0
        %340 = vmatprep.subr.bf16.mxu0 0
        %341 = vmatpush1.bf16.xpose.msra.mxu0 0
        %342 = vmatprep.subr.bf16.mxu0 0
        %343 = vmatpush1.bf16.xpose.msra.mxu0 0
        %344 = vmatprep.subr.bf16.mxu0 0
        %345 = vmatpush1.bf16.xpose.msra.mxu0 0
        %346 = vmatprep.subr.bf16.mxu0 0
        %347 = vmatpush1.bf16.xpose.msra.mxu0 0
        %348 = vmatprep.subr.bf16.mxu0 0
        %349 = vmatpush1.bf16.xpose.msra.mxu0 0
        %350 = vmatprep.subr.bf16.mxu0 0
        %351 = vmatpush1.bf16.xpose.msra.mxu0 0
        %352 = vmatprep.subr.bf16.mxu0 0
        %353 = vmatpush1.bf16.xpose.msra.mxu0 0
        %354 = vmatprep.subr.bf16.mxu0 0
        %355 = vmatpush1.bf16.xpose.msra.mxu0 0
        %356 = vmatprep.subr.bf16.mxu0 0
        %357 = vmatpush1.bf16.xpose.msra.mxu0 0
        %358 = vmatprep.subr.bf16.mxu0 0
        %359 = vmatpush1.bf16.xpose.msra.mxu0 0
        %360 = vmatprep.subr.bf16.mxu0 0
        %361 = vmatpush1.bf16.xpose.msra.mxu0 0
        %362 = vmatprep.subr.bf16.mxu0 0
        %363 = vmatpush1.bf16.xpose.msra.mxu0 0
        %364 = vmatprep.subr.bf16.mxu0 0
        %365 = vmatpush1.bf16.xpose.msra.mxu0 0
        %366 = vmatprep.subr.bf16.mxu0 0
        %367 = vmatpush1.bf16.xpose.msra.mxu0 0
        %368 = vmatprep.mubr.bf16.mxu0 0
        %369 = vmatmul.mubr.bf16.gmra.mrb[0].mxu0 %v331
        %v370 = vpop.f32.mrb[0].mxu0
        %v371 = vadd.f32 0.0, %v370
        %v372 = vpop.f32.mrb[0].mxu0
        %v373 = vpop.f32.mrb[0].mxu0
        %v374 = vpop.f32.mrb[0].mxu0
        %375 = vdwg.mxu0
        %v377 = vsel %vm329, %v310, 0
        %v380 = vsel %vm329, %v318, 0
        %382 = vmatprep.subr.bf16.mxu0 0
        %383 = vmatpush1.bf16.xpose.msra.mxu0 %v380
        %384 = vmatprep.subr.bf16.mxu0 0
        %385 = vmatpush1.bf16.xpose.msra.mxu0 0
        %386 = vmatprep.subr.bf16.mxu0 0
        %387 = vmatpush1.bf16.xpose.msra.mxu0 0
        %388 = vmatprep.subr.bf16.mxu0 0
        %389 = vmatpush1.bf16.xpose.msra.mxu0 0
        %390 = vmatprep.subr.bf16.mxu0 0
        %391 = vmatpush1.bf16.xpose.msra.mxu0 0
        %392 = vmatprep.subr.bf16.mxu0 0
        %393 = vmatpush1.bf16.xpose.msra.mxu0 0
        %394 = vmatprep.subr.bf16.mxu0 0
        %395 = vmatpush1.bf16.xpose.msra.mxu0 0
        %396 = vmatprep.subr.bf16.mxu0 0
        %397 = vmatpush1.bf16.xpose.msra.mxu0 0
        %398 = vmatprep.subr.bf16.mxu0 0
        %399 = vmatpush1.bf16.xpose.msra.mxu0 0
        %400 = vmatprep.subr.bf16.mxu0 0
        %401 = vmatpush1.bf16.xpose.msra.mxu0 0
        %402 = vmatprep.subr.bf16.mxu0 0
        %403 = vmatpush1.bf16.xpose.msra.mxu0 0
        %404 = vmatprep.subr.bf16.mxu0 0
        %405 = vmatpush1.bf16.xpose.msra.mxu0 0
        %406 = vmatprep.subr.bf16.mxu0 0
        %407 = vmatpush1.bf16.xpose.msra.mxu0 0
        %408 = vmatprep.subr.bf16.mxu0 0
        %409 = vmatpush1.bf16.xpose.msra.mxu0 0
        %410 = vmatprep.subr.bf16.mxu0 0
        %411 = vmatpush1.bf16.xpose.msra.mxu0 0
        %412 = vmatprep.subr.bf16.mxu0 0
        %413 = vmatpush1.bf16.xpose.msra.mxu0 0
        %414 = vmatprep.mubr.bf16.mxu0 0
        %415 = vmatmul.mubr.bf16.gmra.mrb[0].mxu0 %v377
        %v416 = vpop.f32.mrb[0].mxu0
        %v417 = vadd.f32 0.0, %v416
        %v418 = vpop.f32.mrb[0].mxu0
        %v419 = vpop.f32.mrb[0].mxu0
        %v420 = vpop.f32.mrb[0].mxu0
        %421 = vdwg.mxu0
        %v423 = vsel %vm329, %v311, 0
        %v426 = vsel %vm329, %v319, 0
        %428 = vmatprep.subr.bf16.mxu0 0
        %429 = vmatpush1.bf16.xpose.msra.mxu0 %v426
        %430 = vmatprep.subr.bf16.mxu0 0
        %431 = vmatpush1.bf16.xpose.msra.mxu0 0
        %432 = vmatprep.subr.bf16.mxu0 0
        %433 = vmatpush1.bf16.xpose.msra.mxu0 0
        %434 = vmatprep.subr.bf16.mxu0 0
        %435 = vmatpush1.bf16.xpose.msra.mxu0 0
        %436 = vmatprep.subr.bf16.mxu0 0
        %437 = vmatpush1.bf16.xpose.msra.mxu0 0
        %438 = vmatprep.subr.bf16.mxu0 0
        %439 = vmatpush1.bf16.xpose.msra.mxu0 0
        %440 = vmatprep.subr.bf16.mxu0 0
        %441 = vmatpush1.bf16.xpose.msra.mxu0 0
        %442 = vmatprep.subr.bf16.mxu0 0
        %443 = vmatpush1.bf16.xpose.msra.mxu0 0
        %444 = vmatprep.subr.bf16.mxu0 0
        %445 = vmatpush1.bf16.xpose.msra.mxu0 0
        %446 = vmatprep.subr.bf16.mxu0 0
        %447 = vmatpush1.bf16.xpose.msra.mxu0 0
        %448 = vmatprep.subr.bf16.mxu0 0
        %449 = vmatpush1.bf16.xpose.msra.mxu0 0
        %450 = vmatprep.subr.bf16.mxu0 0
        %451 = vmatpush1.bf16.xpose.msra.mxu0 0
        %452 = vmatprep.subr.bf16.mxu0 0
        %453 = vmatpush1.bf16.xpose.msra.mxu0 0
        %454 = vmatprep.subr.bf16.mxu0 0
        %455 = vmatpush1.bf16.xpose.msra.mxu0 0
        %456 = vmatprep.subr.bf16.mxu0 0
        %457 = vmatpush1.bf16.xpose.msra.mxu0 0
        %458 = vmatprep.subr.bf16.mxu0 0
        %459 = vmatpush1.bf16.xpose.msra.mxu0 0
        %460 = vmatprep.mubr.bf16.mxu0 0
        %461 = vmatmul.mubr.bf16.gmra.mrb[0].mxu0 %v423
        %v462 = vpop.f32.mrb[0].mxu0
        %v463 = vadd.f32 0.0, %v462
        %v464 = vpop.f32.mrb[0].mxu0
        %v465 = vpop.f32.mrb[0].mxu0
        %v466 = vpop.f32.mrb[0].mxu0
        %467 = vdwg.mxu0
        %v469 = vsel %vm329, %v312, 0
        %v472 = vsel %vm329, %v320, 0
        %474 = vmatprep.subr.bf16.mxu0 0
        %475 = vmatpush1.bf16.xpose.msra.mxu0 %v472
        %476 = vmatprep.subr.bf16.mxu0 0
        %477 = vmatpush1.bf16.xpose.msra.mxu0 0
        %478 = vmatprep.subr.bf16.mxu0 0
        %479 = vmatpush1.bf16.xpose.msra.mxu0 0
        %480 = vmatprep.subr.bf16.mxu0 0
        %481 = vmatpush1.bf16.xpose.msra.mxu0 0
        %482 = vmatprep.subr.bf16.mxu0 0
        %483 = vmatpush1.bf16.xpose.msra.mxu0 0
        %484 = vmatprep.subr.bf16.mxu0 0
        %485 = vmatpush1.bf16.xpose.msra.mxu0 0
        %486 = vmatprep.subr.bf16.mxu0 0
        %487 = vmatpush1.bf16.xpose.msra.mxu0 0
        %488 = vmatprep.subr.bf16.mxu0 0
        %489 = vmatpush1.bf16.xpose.msra.mxu0 0
        %490 = vmatprep.subr.bf16.mxu0 0
        %491 = vmatpush1.bf16.xpose.msra.mxu0 0
        %492 = vmatprep.subr.bf16.mxu0 0
        %493 = vmatpush1.bf16.xpose.msra.mxu0 0
        %494 = vmatprep.subr.bf16.mxu0 0
        %495 = vmatpush1.bf16.xpose.msra.mxu0 0
        %496 = vmatprep.subr.bf16.mxu0 0
        %497 = vmatpush1.bf16.xpose.msra.mxu0 0
        %498 = vmatprep.subr.bf16.mxu0 0
        %499 = vmatpush1.bf16.xpose.msra.mxu0 0
        %500 = vmatprep.subr.bf16.mxu0 0
        %501 = vmatpush1.bf16.xpose.msra.mxu0 0
        %502 = vmatprep.subr.bf16.mxu0 0
        %503 = vmatpush1.bf16.xpose.msra.mxu0 0
        %504 = vmatprep.subr.bf16.mxu0 0
        %505 = vmatpush1.bf16.xpose.msra.mxu0 0
        %506 = vmatprep.mubr.bf16.mxu0 0
        %507 = vmatmul.mubr.bf16.gmra.mrb[0].mxu0 %v469
        %v508 = vpop.f32.mrb[0].mxu0
        %v509 = vadd.f32 0.0, %v508
        %v510 = vpop.f32.mrb[0].mxu0
        %v511 = vpop.f32.mrb[0].mxu0
        %v512 = vpop.f32.mrb[0].mxu0
        %513 = vdwg.mxu0
        %vm514 = vcmask 64512
        %v515 = vsel %vm514, %v371, -inf
        %516 = vmax.xlane.f32.xlu0 %v515
        %v517 = vpop.xlane.xlu0 %516
        %v518 = vsel %vm514, %v417, -inf
        %519 = vmax.xlane.f32.xlu0 %v518
        %v520 = vpop.xlane.xlu0 %519
        %v521 = vsel %vm514, %v463, -inf
        %522 = vmax.xlane.f32.xlu0 %v521
        %v523 = vpop.xlane.xlu0 %522
        %v524 = vsel %vm514, %v509, -inf
        %525 = vmax.xlane.f32.xlu0 %v524
        %v526 = vpop.xlane.xlu0 %525
        %p527 = scmp.eq.s32.totalorder %s30, 0
        // Predicated region
        $region45: #{tpu_custom_call.1} parent=31 // pred_check
          %p528 = pneg %p527
        $region46: #{tpu_custom_call.1} parent=31 // pred_check_branch
          %530 = sbr.rel (%p528) target = $region48
        $region47: #{tpu_custom_call.1} parent=31 // pred_region
          %v531 = vsub.f32 %v371, %v517
          %v532 = vsub.f32 %v417, %v520
          %v533 = vsub.f32 %v463, %v523
          %v534 = vsub.f32 %v509, %v526
          %v535 = vmul.f32 %v531, 1.442695
          %v536 = vpow.pop %v535
          %v537 = vmul.f32 %v532, 1.442695
          %v538 = vpow.pop %v537
          %v539 = vmul.f32 %v533, 1.442695
          %v540 = vpow.pop %v539
          %v541 = vmul.f32 %v534, 1.442695
          %v542 = vpow.pop %v541
          %vm543 = vcmask 7168
          %544 = vst.msk [vmem:[#allocation2] sm:$0xff] %vm543, %v517
          %545 = vst.msk [vmem:[#allocation2 + $0x8] sm:$0xff] %vm543, %v520
          %546 = vst.msk [vmem:[#allocation2 + $0x10] sm:$0xff] %vm543, %v523
          %547 = vst.msk [vmem:[#allocation2 + $0x18] sm:$0xff] %vm543, %v526
          %v548 = vsel %vm514, %v536, 0.0
          %549 = vadd.xlane.f32.xlu0 %v548
          %v550 = vpop.xlane.xlu0 %549
          %v551 = vsel %vm514, %v538, 0.0
          %552 = vadd.xlane.f32.xlu0 %v551
          %v553 = vpop.xlane.xlu0 %552
          %v554 = vsel %vm514, %v540, 0.0
          %555 = vadd.xlane.f32.xlu0 %v554
          %v556 = vpop.xlane.xlu0 %555
          %v557 = vsel %vm514, %v542, 0.0
          %558 = vadd.xlane.f32.xlu0 %v557
          %v559 = vpop.xlane.xlu0 %558
          %560 = vst.msk [vmem:[#allocation3] sm:$0xff] %vm543, %v550
          %561 = vst.msk [vmem:[#allocation3 + $0x8] sm:$0xff] %vm543, %v553
          %562 = vst.msk [vmem:[#allocation3 + $0x10] sm:$0xff] %vm543, %v556
          %563 = vst.msk [vmem:[#allocation3 + $0x18] sm:$0xff] %vm543, %v559
          %v564 = vpack.c.bf16 %v536, %v536
          %v565 = vpack.c.bf16 %v538, %v538
          %v566 = vpack.c.bf16 %v540, %v540
          %v567 = vpack.c.bf16 %v542, %v542
          %v569 = vsel %vm514, %v564, 0
          %vm571 = vcmask 1043456
          %v573 = vsel %vm571, %v325, 0
          %575 = vmatprep.subr.bf16.mxu0 0
          %576 = vmatpush1.bf16.msra.mxu0 %v573
          %577 = vmatprep.subr.bf16.mxu0 0
          %578 = vmatpush1.bf16.msra.mxu0 0
          %579 = vmatprep.subr.bf16.mxu0 0
          %580 = vmatpush1.bf16.msra.mxu0 0
          %581 = vmatprep.subr.bf16.mxu0 0
          %582 = vmatpush1.bf16.msra.mxu0 0
          %583 = vmatprep.subr.bf16.mxu0 0
          %584 = vmatpush1.bf16.msra.mxu0 0
          %585 = vmatprep.subr.bf16.mxu0 0
          %586 = vmatpush1.bf16.msra.mxu0 0
          %587 = vmatprep.subr.bf16.mxu0 0
          %588 = vmatpush1.bf16.msra.mxu0 0
          %589 = vmatprep.subr.bf16.mxu0 0
          %590 = vmatpush1.bf16.msra.mxu0 0
          %591 = vmatprep.subr.bf16.mxu0 0
          %592 = vmatpush1.bf16.msra.mxu0 0
          %593 = vmatprep.subr.bf16.mxu0 0
          %594 = vmatpush1.bf16.msra.mxu0 0
          %595 = vmatprep.subr.bf16.mxu0 0
          %596 = vmatpush1.bf16.msra.mxu0 0
          %597 = vmatprep.subr.bf16.mxu0 0
          %598 = vmatpush1.bf16.msra.mxu0 0
          %599 = vmatprep.subr.bf16.mxu0 0
          %600 = vmatpush1.bf16.msra.mxu0 0
          %601 = vmatprep.subr.bf16.mxu0 0
          %602 = vmatpush1.bf16.msra.mxu0 0
          %603 = vmatprep.subr.bf16.mxu0 0
          %604 = vmatpush1.bf16.msra.mxu0 0
          %605 = vmatprep.subr.bf16.mxu0 0
          %606 = vmatpush1.bf16.msra.mxu0 0
          %607 = vmatprep.mubr.bf16.mxu0 0
          %608 = vmatmul.mubr.bf16.gmra.mrb[0].mxu0 %v569
          %v609 = vpop.f32.mrb[0].mxu0
          %v610 = vadd.f32 0.0, %v609
          %v611 = vpop.f32.mrb[0].mxu0
          %v612 = vpop.f32.mrb[0].mxu0
          %v613 = vpop.f32.mrb[0].mxu0
          %614 = vdwg.mxu0
          %v616 = vsel %vm514, %v565, 0
          %v619 = vsel %vm571, %v326, 0
          %621 = vmatprep.subr.bf16.mxu0 0
          %622 = vmatpush1.bf16.msra.mxu0 %v619
          %623 = vmatprep.subr.bf16.mxu0 0
          %624 = vmatpush1.bf16.msra.mxu0 0
          %625 = vmatprep.subr.bf16.mxu0 0
          %626 = vmatpush1.bf16.msra.mxu0 0
          %627 = vmatprep.subr.bf16.mxu0 0
          %628 = vmatpush1.bf16.msra.mxu0 0
          %629 = vmatprep.subr.bf16.mxu0 0
          %630 = vmatpush1.bf16.msra.mxu0 0
          %631 = vmatprep.subr.bf16.mxu0 0
          %632 = vmatpush1.bf16.msra.mxu0 0
          %633 = vmatprep.subr.bf16.mxu0 0
          %634 = vmatpush1.bf16.msra.mxu0 0
          %635 = vmatprep.subr.bf16.mxu0 0
          %636 = vmatpush1.bf16.msra.mxu0 0
          %637 = vmatprep.subr.bf16.mxu0 0
          %638 = vmatpush1.bf16.msra.mxu0 0
          %639 = vmatprep.subr.bf16.mxu0 0
          %640 = vmatpush1.bf16.msra.mxu0 0
          %641 = vmatprep.subr.bf16.mxu0 0
          %642 = vmatpush1.bf16.msra.mxu0 0
          %643 = vmatprep.subr.bf16.mxu0 0
          %644 = vmatpush1.bf16.msra.mxu0 0
          %645 = vmatprep.subr.bf16.mxu0 0
          %646 = vmatpush1.bf16.msra.mxu0 0
          %647 = vmatprep.subr.bf16.mxu0 0
          %648 = vmatpush1.bf16.msra.mxu0 0
          %649 = vmatprep.subr.bf16.mxu0 0
          %650 = vmatpush1.bf16.msra.mxu0 0
          %651 = vmatprep.subr.bf16.mxu0 0
          %652 = vmatpush1.bf16.msra.mxu0 0
          %653 = vmatprep.mubr.bf16.mxu0 0
          %654 = vmatmul.mubr.bf16.gmra.mrb[0].mxu0 %v616
          %v655 = vpop.f32.mrb[0].mxu0
          %v656 = vadd.f32 0.0, %v655
          %v657 = vpop.f32.mrb[0].mxu0
          %v658 = vpop.f32.mrb[0].mxu0
          %v659 = vpop.f32.mrb[0].mxu0
          %660 = vdwg.mxu0
          %v662 = vsel %vm514, %v566, 0
          %v665 = vsel %vm571, %v327, 0
          %667 = vmatprep.subr.bf16.mxu0 0
          %668 = vmatpush1.bf16.msra.mxu0 %v665
          %669 = vmatprep.subr.bf16.mxu0 0
          %670 = vmatpush1.bf16.msra.mxu0 0
          %671 = vmatprep.subr.bf16.mxu0 0
          %672 = vmatpush1.bf16.msra.mxu0 0
          %673 = vmatprep.subr.bf16.mxu0 0
          %674 = vmatpush1.bf16.msra.mxu0 0
          %675 = vmatprep.subr.bf16.mxu0 0
          %676 = vmatpush1.bf16.msra.mxu0 0
          %677 = vmatprep.subr.bf16.mxu0 0
          %678 = vmatpush1.bf16.msra.mxu0 0
          %679 = vmatprep.subr.bf16.mxu0 0
          %680 = vmatpush1.bf16.msra.mxu0 0
          %681 = vmatprep.subr.bf16.mxu0 0
          %682 = vmatpush1.bf16.msra.mxu0 0
          %683 = vmatprep.subr.bf16.mxu0 0
          %684 = vmatpush1.bf16.msra.mxu0 0
          %685 = vmatprep.subr.bf16.mxu0 0
          %686 = vmatpush1.bf16.msra.mxu0 0
          %687 = vmatprep.subr.bf16.mxu0 0
          %688 = vmatpush1.bf16.msra.mxu0 0
          %689 = vmatprep.subr.bf16.mxu0 0
          %690 = vmatpush1.bf16.msra.mxu0 0
          %691 = vmatprep.subr.bf16.mxu0 0
          %692 = vmatpush1.bf16.msra.mxu0 0
          %693 = vmatprep.subr.bf16.mxu0 0
          %694 = vmatpush1.bf16.msra.mxu0 0
          %695 = vmatprep.subr.bf16.mxu0 0
          %696 = vmatpush1.bf16.msra.mxu0 0
          %697 = vmatprep.subr.bf16.mxu0 0
          %698 = vmatpush1.bf16.msra.mxu0 0
          %699 = vmatprep.mubr.bf16.mxu0 0
          %700 = vmatmul.mubr.bf16.gmra.mrb[0].mxu0 %v662
          %v701 = vpop.f32.mrb[0].mxu0
          %v702 = vadd.f32 0.0, %v701
          %v703 = vpop.f32.mrb[0].mxu0
          %v704 = vpop.f32.mrb[0].mxu0
          %v705 = vpop.f32.mrb[0].mxu0
          %706 = vdwg.mxu0
          %v708 = vsel %vm514, %v567, 0
          %v711 = vsel %vm571, %v328, 0
          %713 = vmatprep.subr.bf16.mxu0 0
          %714 = vmatpush1.bf16.msra.mxu0 %v711
          %715 = vmatprep.subr.bf16.mxu0 0
          %716 = vmatpush1.bf16.msra.mxu0 0
          %717 = vmatprep.subr.bf16.mxu0 0
          %718 = vmatpush1.bf16.msra.mxu0 0
          %719 = vmatprep.subr.bf16.mxu0 0
          %720 = vmatpush1.bf16.msra.mxu0 0
          %721 = vmatprep.subr.bf16.mxu0 0
          %722 = vmatpush1.bf16.msra.mxu0 0
          %723 = vmatprep.subr.bf16.mxu0 0
          %724 = vmatpush1.bf16.msra.mxu0 0
          %725 = vmatprep.subr.bf16.mxu0 0
          %726 = vmatpush1.bf16.msra.mxu0 0
          %727 = vmatprep.subr.bf16.mxu0 0
          %728 = vmatpush1.bf16.msra.mxu0 0
          %729 = vmatprep.subr.bf16.mxu0 0
          %730 = vmatpush1.bf16.msra.mxu0 0
          %731 = vmatprep.subr.bf16.mxu0 0
          %732 = vmatpush1.bf16.msra.mxu0 0
          %733 = vmatprep.subr.bf16.mxu0 0
          %734 = vmatpush1.bf16.msra.mxu0 0
          %735 = vmatprep.subr.bf16.mxu0 0
          %736 = vmatpush1.bf16.msra.mxu0 0
          %737 = vmatprep.subr.bf16.mxu0 0
          %738 = vmatpush1.bf16.msra.mxu0 0
          %739 = vmatprep.subr.bf16.mxu0 0
          %740 = vmatpush1.bf16.msra.mxu0 0
          %741 = vmatprep.subr.bf16.mxu0 0
          %742 = vmatpush1.bf16.msra.mxu0 0
          %743 = vmatprep.subr.bf16.mxu0 0
          %744 = vmatpush1.bf16.msra.mxu0 0
          %745 = vmatprep.mubr.bf16.mxu0 0
          %746 = vmatmul.mubr.bf16.gmra.mrb[0].mxu0 %v708
          %v747 = vpop.f32.mrb[0].mxu0
          %v748 = vadd.f32 0.0, %v747
          %v749 = vpop.f32.mrb[0].mxu0
          %v750 = vpop.f32.mrb[0].mxu0
          %v751 = vpop.f32.mrb[0].mxu0
          %752 = vdwg.mxu0
          %753 = vst.msk [vmem:[#allocation4] sm:$0xff] %vm329, %v610
          %754 = vst.msk [vmem:[#allocation4 + $0x8] sm:$0xff] %vm329, %v656
          %755 = vst.msk [vmem:[#allocation4 + $0x10] sm:$0xff] %vm329, %v702
          %756 = vst.msk [vmem:[#allocation4 + $0x18] sm:$0xff] %vm329, %v748
        $region48: #{tpu_custom_call.1} parent=31 // pred_fallthru
          _
        %p757 = scmp.gt.s32.totalorder %s30, 0
        // Predicated region
        $region49: #{tpu_custom_call.1} parent=31 // pred_check
          %p758 = pneg %p757
        $region50: #{tpu_custom_call.1} parent=31 // pred_check_branch
          %760 = sbr.rel (%p758) target = $region52
        $region51: #{tpu_custom_call.1} parent=31 // pred_region
          %v761 = vld [vmem:[#allocation2] sm:$0xff]
          %v762 = vld [vmem:[#allocation2 + $0x8] sm:$0xff]
          %v763 = vld [vmem:[#allocation2 + $0x10] sm:$0xff]
          %v764 = vld [vmem:[#allocation2 + $0x18] sm:$0xff]
          %v765 = vmax.f32 %v761, %v517
          %v766 = vmax.f32 %v762, %v520
          %v767 = vmax.f32 %v763, %v523
          %v768 = vmax.f32 %v764, %v526
          %v769 = vsub.f32 %v761, %v765
          %v770 = vsub.f32 %v762, %v766
          %v771 = vsub.f32 %v763, %v767
          %v772 = vsub.f32 %v764, %v768
          %v773 = vmul.f32 %v769, 1.442695
          %v774 = vpow.pop %v773
          %v775 = vmul.f32 %v770, 1.442695
          %v776 = vpow.pop %v775
          %v777 = vmul.f32 %v771, 1.442695
          %v778 = vpow.pop %v777
          %v779 = vmul.f32 %v772, 1.442695
          %v780 = vpow.pop %v779
          %782 = vset.pattern.permute.xlu0 0
          %783 = vperm.xlu0 %782, %v765
          %v784 = vpop.permute.xlu0 %783
          %787 = vset.pattern.permute.xlu0 0
          %788 = vperm.xlu0 %787, %v766
          %v789 = vpop.permute.xlu0 %788
          %792 = vset.pattern.permute.xlu0 0
          %793 = vperm.xlu0 %792, %v767
          %v794 = vpop.permute.xlu0 %793
          %797 = vset.pattern.permute.xlu0 0
          %798 = vperm.xlu0 %797, %v768
          %v799 = vpop.permute.xlu0 %798
          %v801 = vsub.f32 %v371, %v784
          %v802 = vsub.f32 %v417, %v789
          %v803 = vsub.f32 %v463, %v794
          %v804 = vsub.f32 %v509, %v799
          %v805 = vmul.f32 %v801, 1.442695
          %v806 = vpow.pop %v805
          %v807 = vmul.f32 %v802, 1.442695
          %v808 = vpow.pop %v807
          %v809 = vmul.f32 %v803, 1.442695
          %v810 = vpow.pop %v809
          %v811 = vmul.f32 %v804, 1.442695
          %v812 = vpow.pop %v811
          %v813 = vld [vmem:[#allocation3] sm:$0xff]
          %v814 = vld [vmem:[#allocation3 + $0x8] sm:$0xff]
          %v815 = vld [vmem:[#allocation3 + $0x10] sm:$0xff]
          %v816 = vld [vmem:[#allocation3 + $0x18] sm:$0xff]
          %v817 = vmul.f32 %v774, %v813
          %v818 = vmul.f32 %v776, %v814
          %v819 = vmul.f32 %v778, %v815
          %v820 = vmul.f32 %v780, %v816
          %v821 = vsel %vm514, %v806, 0.0
          %822 = vadd.xlane.f32.xlu0 %v821
          %v823 = vpop.xlane.xlu0 %822
          %v824 = vsel %vm514, %v808, 0.0
          %825 = vadd.xlane.f32.xlu0 %v824
          %v826 = vpop.xlane.xlu0 %825
          %v827 = vsel %vm514, %v810, 0.0
          %828 = vadd.xlane.f32.xlu0 %v827
          %v829 = vpop.xlane.xlu0 %828
          %v830 = vsel %vm514, %v812, 0.0
          %831 = vadd.xlane.f32.xlu0 %v830
          %v832 = vpop.xlane.xlu0 %831
          %v833 = vadd.f32 %v817, %v823
          %v834 = vadd.f32 %v818, %v826
          %v835 = vadd.f32 %v819, %v829
          %v836 = vadd.f32 %v820, %v832
          %vm837 = vcmask 7168
          %838 = vst.msk [vmem:[#allocation3] sm:$0xff] %vm837, %v833
          %839 = vst.msk [vmem:[#allocation3 + $0x8] sm:$0xff] %vm837, %v834
          %840 = vst.msk [vmem:[#allocation3 + $0x10] sm:$0xff] %vm837, %v835
          %841 = vst.msk [vmem:[#allocation3 + $0x18] sm:$0xff] %vm837, %v836
          %v842 = vld [vmem:[#allocation4] sm:$0xff]
          %v843 = vld [vmem:[#allocation4 + $0x8] sm:$0xff]
          %v844 = vld [vmem:[#allocation4 + $0x10] sm:$0xff]
          %v845 = vld [vmem:[#allocation4 + $0x18] sm:$0xff]
          %847 = vset.pattern.permute.xlu0 0
          %848 = vperm.xlu0 %847, %v774
          %v849 = vpop.permute.xlu0 %848
          %852 = vset.pattern.permute.xlu0 0
          %853 = vperm.xlu0 %852, %v776
          %v854 = vpop.permute.xlu0 %853
          %857 = vset.pattern.permute.xlu0 0
          %858 = vperm.xlu0 %857, %v778
          %v859 = vpop.permute.xlu0 %858
          %862 = vset.pattern.permute.xlu0 0
          %863 = vperm.xlu0 %862, %v780
          %v864 = vpop.permute.xlu0 %863
          %v866 = vmul.f32 %v849, %v842
          %v867 = vmul.f32 %v854, %v843
          %v868 = vmul.f32 %v859, %v844
          %v869 = vmul.f32 %v864, %v845
          %v870 = vpack.c.bf16 %v806, %v806
          %v871 = vpack.c.bf16 %v808, %v808
          %v872 = vpack.c.bf16 %v810, %v810
          %v873 = vpack.c.bf16 %v812, %v812
          %v875 = vsel %vm514, %v870, 0
          %vm877 = vcmask 1043456
          %v879 = vsel %vm877, %v325, 0
          %881 = vmatprep.subr.bf16.mxu0 0
          %882 = vmatpush1.bf16.msra.mxu0 %v879
          %883 = vmatprep.subr.bf16.mxu0 0
          %884 = vmatpush1.bf16.msra.mxu0 0
          %885 = vmatprep.subr.bf16.mxu0 0
          %886 = vmatpush1.bf16.msra.mxu0 0
          %887 = vmatprep.subr.bf16.mxu0 0
          %888 = vmatpush1.bf16.msra.mxu0 0
          %889 = vmatprep.subr.bf16.mxu0 0
          %890 = vmatpush1.bf16.msra.mxu0 0
          %891 = vmatprep.subr.bf16.mxu0 0
          %892 = vmatpush1.bf16.msra.mxu0 0
          %893 = vmatprep.subr.bf16.mxu0 0
          %894 = vmatpush1.bf16.msra.mxu0 0
          %895 = vmatprep.subr.bf16.mxu0 0
          %896 = vmatpush1.bf16.msra.mxu0 0
          %897 = vmatprep.subr.bf16.mxu0 0
          %898 = vmatpush1.bf16.msra.mxu0 0
          %899 = vmatprep.subr.bf16.mxu0 0
          %900 = vmatpush1.bf16.msra.mxu0 0
          %901 = vmatprep.subr.bf16.mxu0 0
          %902 = vmatpush1.bf16.msra.mxu0 0
          %903 = vmatprep.subr.bf16.mxu0 0
          %904 = vmatpush1.bf16.msra.mxu0 0
          %905 = vmatprep.subr.bf16.mxu0 0
          %906 = vmatpush1.bf16.msra.mxu0 0
          %907 = vmatprep.subr.bf16.mxu0 0
          %908 = vmatpush1.bf16.msra.mxu0 0
          %909 = vmatprep.subr.bf16.mxu0 0
          %910 = vmatpush1.bf16.msra.mxu0 0
          %911 = vmatprep.subr.bf16.mxu0 0
          %912 = vmatpush1.bf16.msra.mxu0 0
          %913 = vmatprep.mubr.bf16.mxu0 0
          %914 = vmatmul.mubr.bf16.gmra.mrb[0].mxu0 %v875
          %v915 = vpop.f32.mrb[0].mxu0
          %v916 = vadd.f32 0.0, %v915
          %v917 = vpop.f32.mrb[0].mxu0
          %v918 = vpop.f32.mrb[0].mxu0
          %v919 = vpop.f32.mrb[0].mxu0
          %920 = vdwg.mxu0
          %v922 = vsel %vm514, %v871, 0
          %v925 = vsel %vm877, %v326, 0
          %927 = vmatprep.subr.bf16.mxu0 0
          %928 = vmatpush1.bf16.msra.mxu0 %v925
          %929 = vmatprep.subr.bf16.mxu0 0
          %930 = vmatpush1.bf16.msra.mxu0 0
          %931 = vmatprep.subr.bf16.mxu0 0
          %932 = vmatpush1.bf16.msra.mxu0 0
          %933 = vmatprep.subr.bf16.mxu0 0
          %934 = vmatpush1.bf16.msra.mxu0 0
          %935 = vmatprep.subr.bf16.mxu0 0
          %936 = vmatpush1.bf16.msra.mxu0 0
          %937 = vmatprep.subr.bf16.mxu0 0
          %938 = vmatpush1.bf16.msra.mxu0 0
          %939 = vmatprep.subr.bf16.mxu0 0
          %940 = vmatpush1.bf16.msra.mxu0 0
          %941 = vmatprep.subr.bf16.mxu0 0
          %942 = vmatpush1.bf16.msra.mxu0 0
          %943 = vmatprep.subr.bf16.mxu0 0
          %944 = vmatpush1.bf16.msra.mxu0 0
          %945 = vmatprep.subr.bf16.mxu0 0
          %946 = vmatpush1.bf16.msra.mxu0 0
          %947 = vmatprep.subr.bf16.mxu0 0
          %948 = vmatpush1.bf16.msra.mxu0 0
          %949 = vmatprep.subr.bf16.mxu0 0
          %950 = vmatpush1.bf16.msra.mxu0 0
          %951 = vmatprep.subr.bf16.mxu0 0
          %952 = vmatpush1.bf16.msra.mxu0 0
          %953 = vmatprep.subr.bf16.mxu0 0
          %954 = vmatpush1.bf16.msra.mxu0 0
          %955 = vmatprep.subr.bf16.mxu0 0
          %956 = vmatpush1.bf16.msra.mxu0 0
          %957 = vmatprep.subr.bf16.mxu0 0
          %958 = vmatpush1.bf16.msra.mxu0 0
          %959 = vmatprep.mubr.bf16.mxu0 0
          %960 = vmatmul.mubr.bf16.gmra.mrb[0].mxu0 %v922
          %v961 = vpop.f32.mrb[0].mxu0
          %v962 = vadd.f32 0.0, %v961
          %v963 = vpop.f32.mrb[0].mxu0
          %v964 = vpop.f32.mrb[0].mxu0
          %v965 = vpop.f32.mrb[0].mxu0
          %966 = vdwg.mxu0
          %v968 = vsel %vm514, %v872, 0
          %v971 = vsel %vm877, %v327, 0
          %973 = vmatprep.subr.bf16.mxu0 0
          %974 = vmatpush1.bf16.msra.mxu0 %v971
          %975 = vmatprep.subr.bf16.mxu0 0
          %976 = vmatpush1.bf16.msra.mxu0 0
          %977 = vmatprep.subr.bf16.mxu0 0
          %978 = vmatpush1.bf16.msra.mxu0 0
          %979 = vmatprep.subr.bf16.mxu0 0
          %980 = vmatpush1.bf16.msra.mxu0 0
          %981 = vmatprep.subr.bf16.mxu0 0
          %982 = vmatpush1.bf16.msra.mxu0 0
          %983 = vmatprep.subr.bf16.mxu0 0
          %984 = vmatpush1.bf16.msra.mxu0 0
          %985 = vmatprep.subr.bf16.mxu0 0
          %986 = vmatpush1.bf16.msra.mxu0 0
          %987 = vmatprep.subr.bf16.mxu0 0
          %988 = vmatpush1.bf16.msra.mxu0 0
          %989 = vmatprep.subr.bf16.mxu0 0
          %990 = vmatpush1.bf16.msra.mxu0 0
          %991 = vmatprep.subr.bf16.mxu0 0
          %992 = vmatpush1.bf16.msra.mxu0 0
          %993 = vmatprep.subr.bf16.mxu0 0
          %994 = vmatpush1.bf16.msra.mxu0 0
          %995 = vmatprep.subr.bf16.mxu0 0
          %996 = vmatpush1.bf16.msra.mxu0 0
          %997 = vmatprep.subr.bf16.mxu0 0
          %998 = vmatpush1.bf16.msra.mxu0 0
          %999 = vmatprep.subr.bf16.mxu0 0
          %1000 = vmatpush1.bf16.msra.mxu0 0
          %1001 = vmatprep.subr.bf16.mxu0 0
          %1002 = vmatpush1.bf16.msra.mxu0 0
          %1003 = vmatprep.subr.bf16.mxu0 0
          %1004 = vmatpush1.bf16.msra.mxu0 0
          %1005 = vmatprep.mubr.bf16.mxu0 0
          %1006 = vmatmul.mubr.bf16.gmra.mrb[0].mxu0 %v968
          %v1007 = vpop.f32.mrb[0].mxu0
          %v1008 = vadd.f32 0.0, %v1007
          %v1009 = vpop.f32.mrb[0].mxu0
          %v1010 = vpop.f32.mrb[0].mxu0
          %v1011 = vpop.f32.mrb[0].mxu0
          %1012 = vdwg.mxu0
          %v1014 = vsel %vm514, %v873, 0
          %v1017 = vsel %vm877, %v328, 0
          %1019 = vmatprep.subr.bf16.mxu0 0
          %1020 = vmatpush1.bf16.msra.mxu0 %v1017
          %1021 = vmatprep.subr.bf16.mxu0 0
          %1022 = vmatpush1.bf16.msra.mxu0 0
          %1023 = vmatprep.subr.bf16.mxu0 0
          %1024 = vmatpush1.bf16.msra.mxu0 0
          %1025 = vmatprep.subr.bf16.mxu0 0
          %1026 = vmatpush1.bf16.msra.mxu0 0
          %1027 = vmatprep.subr.bf16.mxu0 0
          %1028 = vmatpush1.bf16.msra.mxu0 0
          %1029 = vmatprep.subr.bf16.mxu0 0
          %1030 = vmatpush1.bf16.msra.mxu0 0
          %1031 = vmatprep.subr.bf16.mxu0 0
          %1032 = vmatpush1.bf16.msra.mxu0 0
          %1033 = vmatprep.subr.bf16.mxu0 0
          %1034 = vmatpush1.bf16.msra.mxu0 0
          %1035 = vmatprep.subr.bf16.mxu0 0
          %1036 = vmatpush1.bf16.msra.mxu0 0
          %1037 = vmatprep.subr.bf16.mxu0 0
          %1038 = vmatpush1.bf16.msra.mxu0 0
          %1039 = vmatprep.subr.bf16.mxu0 0
          %1040 = vmatpush1.bf16.msra.mxu0 0
          %1041 = vmatprep.subr.bf16.mxu0 0
          %1042 = vmatpush1.bf16.msra.mxu0 0
          %1043 = vmatprep.subr.bf16.mxu0 0
          %1044 = vmatpush1.bf16.msra.mxu0 0
          %1045 = vmatprep.subr.bf16.mxu0 0
          %1046 = vmatpush1.bf16.msra.mxu0 0
          %1047 = vmatprep.subr.bf16.mxu0 0
          %1048 = vmatpush1.bf16.msra.mxu0 0
          %1049 = vmatprep.subr.bf16.mxu0 0
          %1050 = vmatpush1.bf16.msra.mxu0 0
          %1051 = vmatprep.mubr.bf16.mxu0 0
          %1052 = vmatmul.mubr.bf16.gmra.mrb[0].mxu0 %v1014
          %v1053 = vpop.f32.mrb[0].mxu0
          %v1054 = vadd.f32 0.0, %v1053
          %v1055 = vpop.f32.mrb[0].mxu0
          %v1056 = vpop.f32.mrb[0].mxu0
          %v1057 = vpop.f32.mrb[0].mxu0
          %1058 = vdwg.mxu0
          %v1059 = vadd.f32 %v866, %v916
          %v1060 = vadd.f32 %v867, %v962
          %v1061 = vadd.f32 %v868, %v1008
          %v1062 = vadd.f32 %v869, %v1054
          %1063 = vst.msk [vmem:[#allocation4] sm:$0xff] %vm329, %v1059
          %1064 = vst.msk [vmem:[#allocation4 + $0x8] sm:$0xff] %vm329, %v1060
          %1065 = vst.msk [vmem:[#allocation4 + $0x10] sm:$0xff] %vm329, %v1061
          %1066 = vst.msk [vmem:[#allocation4 + $0x18] sm:$0xff] %vm329, %v1062
          %1067 = vst.msk [vmem:[#allocation2] sm:$0xff] %vm837, %v765
          %1068 = vst.msk [vmem:[#allocation2 + $0x8] sm:$0xff] %vm837, %v766
          %1069 = vst.msk [vmem:[#allocation2 + $0x10] sm:$0xff] %vm837, %v767
          %1070 = vst.msk [vmem:[#allocation2 + $0x18] sm:$0xff] %vm837, %v768
        $region52: #{tpu_custom_call.1} parent=31 // pred_fallthru
          _
        // Predicated region
        $region53: #{tpu_custom_call.1} parent=31 // pred_check
          %p1071 = pneg %p527
        $region54: #{tpu_custom_call.1} parent=31 // pred_check_branch
          %1073 = sbr.rel (%p1071) target = $region56
        $region55: #{tpu_custom_call.1} parent=31 // pred_region
          %v1074 = vld [vmem:[#allocation3] sm:$0xff]
          %v1075 = vld [vmem:[#allocation3 + $0x8] sm:$0xff]
          %v1076 = vld [vmem:[#allocation3 + $0x10] sm:$0xff]
          %v1077 = vld [vmem:[#allocation3 + $0x18] sm:$0xff]
          %v1078 = vld [vmem:[#allocation4] sm:$0xff]
          %v1079 = vld [vmem:[#allocation4 + $0x8] sm:$0xff]
          %v1080 = vld [vmem:[#allocation4 + $0x10] sm:$0xff]
          %v1081 = vld [vmem:[#allocation4 + $0x18] sm:$0xff]
          %1083 = vset.pattern.permute.xlu0 0
          %1084 = vperm.xlu0 %1083, %v1074
          %v1085 = vpop.permute.xlu0 %1084
          %1088 = vset.pattern.permute.xlu0 0
          %1089 = vperm.xlu0 %1088, %v1075
          %v1090 = vpop.permute.xlu0 %1089
          %1093 = vset.pattern.permute.xlu0 0
          %1094 = vperm.xlu0 %1093, %v1076
          %v1095 = vpop.permute.xlu0 %1094
          %1098 = vset.pattern.permute.xlu0 0
          %1099 = vperm.xlu0 %1098, %v1077
          %v1100 = vpop.permute.xlu0 %1099
          %v1102 = vrcp.pop %v1085
          %v1103 = vmul.f32 %v1078, %v1102
          %v1104 = vrcp.pop %v1090
          %v1105 = vmul.f32 %v1079, %v1104
          %v1106 = vrcp.pop %v1095
          %v1107 = vmul.f32 %v1080, %v1106
          %v1108 = vrcp.pop %v1100
          %v1109 = vmul.f32 %v1081, %v1108
          %1110 = vst.msk [vmem:[%s295] sm:$0xff] %vm329, %v1103
          %1111 = vst.msk [vmem:[%s295 + $0x8] sm:$0xff] %vm329, %v1105
          %1112 = vst.msk [vmem:[%s295 + $0x10] sm:$0xff] %vm329, %v1107
          %1113 = vst.msk [vmem:[%s295 + $0x18] sm:$0xff] %vm329, %v1109
        $region56: #{tpu_custom_call.1} parent=31 // pred_fallthru
          _
        %s1114 = sand.u32 %s136, 1
        %s1115 = scalar_lea.sflag [#allocation7], %s1114
        %s1116 = sand.u32 %s136, 1
        %s1117 = smul.addr %s1116, 32
        %s1118 = scalar_lea.vmem [#allocation11], %s1117
        // Predicated region
        $region57: #{tpu_custom_call.1} parent=31 // pred_check
          %p1119 = pneg %p146
        $region58: #{tpu_custom_call.1} parent=31 // pred_check_branch
          %1121 = sbr.rel (%p1119) target = $region60
        $region59: #{tpu_custom_call.1} parent=31 // pred_region
          %s1122 = smul.u32 4, %s28
          %s1124 = ssub.s32 512, 512
          %1125 = vsyncadd %s1115, %s1124
          %s1126 = sadd.s32 %s29, %s1122
          %s1127 = smul.addr %s1126, 128
          %s1128 = scalar_lea.hbm %s3, %s1127
          %s1129 = sshll.u32 %s1118, 4
          %s1130 = int_to_ptr.vmem [resolvable:$true] %s1129
          %1135 = dma.vmem_to_hbm [thread:$0]  %s1130, 512, %s1128, %s1115, 128, 128, 8
        $region60: #{tpu_custom_call.1} parent=31 // pred_fallthru
          _
      $region32: #{tpu_custom_call.1} parent=5 // pred_fallthru
        _
      %p1136 = scmp.le.s32.totalorder 2, %s18
      // Predicated region
      $region61: #{tpu_custom_call.1} parent=5 // pred_check
        %p1137 = pneg %p1136
      $region62: #{tpu_custom_call.1} parent=5 // pred_check_branch
        %1139 = sbr.rel (%p1137) target = $region64
      $region63: #{tpu_custom_call.1} parent=5 // pred_region
        %s1140 = ssub.s32 %s18, 2
        // Predicated region
        $region65: #{tpu_custom_call.1} parent=63 // pred_check
          %p1141 = pneg %p152
        $region66: #{tpu_custom_call.1} parent=63 // pred_check_branch
          %1143 = sbr.rel (%p1141) target = $region68
        $region67: #{tpu_custom_call.1} parent=63 // pred_region
          %s1144 = sand.u32 %s137, 1
          %s1145 = scalar_lea.sflag [#allocation7], %s1144
          %s1146 = sand.u32 %s137, 1
          %s1147 = smul.addr %s1146, 32
          %s1148 = scalar_lea.vmem [#allocation11], %s1147
          %1149 = dma.done %s1145, 512
        $region68: #{tpu_custom_call.1} parent=63 // pred_fallthru
          _
      $region64: #{tpu_custom_call.1} parent=5 // pred_fallthru
        _
    $region6: #{tpu_custom_call.1} parent=1 // loop_footer
      %s22 = sadd.s32 1, %s18
    $region7: #{tpu_custom_call.1} parent=1 // loop_footer_branch
      %17 = sbr.rel target = $region3
    $region8: #{tpu_custom_call.1} parent=1 // loop_exit
      _
    %1150 = vsyncpa [#allocation6], 1
    %s1151 = scalar_lea.sflag [#allocation6], 1
    %1152 = vsyncpa %s1151, 1
    %1153 = vsyncpa [#allocation9], 1
    %s1154 = scalar_lea.sflag [#allocation9], 1
    %1155 = vsyncpa %s1154, 1
    %1156 = vsyncpa [#allocation7], 1
    %s1157 = scalar_lea.sflag [#allocation7], 1
    %1158 = vsyncpa %s1157, 1

</llo_original>
